<compile_context>
chip_gen: v5e
topology: v5e:2x2
jax: 0.10.0
libtpu: 0.0.40
codegen_flags: <defaults>
</compile_context>

<pallas_src>
import jax
import jax.numpy as jnp
from jax.experimental import pallas as pl
from jax.experimental.pallas import tpu as pltpu

IN_F = 4   # CartPole observation size, nn.Linear(4, 2)
OUT_F = 2


def _round_up(n, m):
    return ((n + m - 1) // m) * m


def _linear_kernel(w_ref, b_ref, x_ref, o_ref):
    """One (TB, IN_F) -> (TB, OUT_F) tile of out = x @ W^T + b.

    w_ref : SMEM (OUT_F*IN_F,) f32, row-major nn.Linear weight W[n, k].
    b_ref : SMEM (OUT_F,) f32.
    x_ref : VMEM (TB, IN_F) tile of x.
    o_ref : VMEM (TB, OUT_F) tile of the output.
    """
    tb = x_ref.shape[0]
    x = x_ref[...].astype(jnp.float32)  # f32 accumulation (torch semantics)

    # Per-lane output-column index; used to splat the right SMEM scalar into
    # each of the OUT_F output lanes.  Pure VPU (iota + select), no XLU/MXU.
    col = jax.lax.broadcasted_iota(jnp.int32, (tb, OUT_F), 1)

    def splat(scalars):  # scalars: list of OUT_F traced f32 scalars
        v = jnp.full((tb, OUT_F), scalars[0], dtype=jnp.float32)
        for n in range(1, OUT_F):
            v = jnp.where(col == n, scalars[n], v)
        return v

    acc = splat([b_ref[n] for n in range(OUT_F)])
    for k in range(IN_F):
        wk = splat([w_ref[n * IN_F + k] for n in range(OUT_F)])
        acc = acc + x[:, k:k + 1] * wk        # (TB,1) lane-broadcast FMA
    o_ref[...] = acc.astype(o_ref.dtype)


def logistic_rg_forward(x, weight, bias, *, block_rows=1024, use_pallas=None):
    """Pallas equivalent of logisticRg.forward: returns (x @ W^T + b, x)."""
    B, in_f = x.shape
    out_f = weight.shape[0]
    assert (in_f, out_f) == (IN_F, OUT_F)

    if use_pallas is None:
        # 2*B*8 FLOPs never pays for a custom-call boundary at small B; let
        # XLA fuse the dot+add unless the batch is large (memory-bound regime).
        use_pallas = B >= 4096
    if not use_pallas:
        return (x @ weight.T + bias).astype(x.dtype), x

    # Sublane-aligned batch tile: 8 <= TB <= block_rows, TB % 8 == 0.
    tb = min(block_rows, _round_up(B, 8))
    padded_b = _round_up(B, tb)
    x_in = x if padded_b == B else jnp.pad(x, ((0, padded_b - B), (0, 0)))
    grid = (padded_b // tb,)

    # The 10 parameter scalars live in SMEM (f32), read via scalar-load slots.
    w_flat = weight.astype(jnp.float32).reshape(out_f * in_f)
    b_flat = bias.astype(jnp.float32).reshape(out_f)

    itemsize = jnp.dtype(x.dtype).itemsize
    out = pl.pallas_call(
        _linear_kernel,
        out_shape=jax.ShapeDtypeStruct((padded_b, out_f), x.dtype),
        grid=grid,
        in_specs=[
            pl.BlockSpec(memory_space=pltpu.MemorySpace.SMEM),   # weight scalars
            pl.BlockSpec(memory_space=pltpu.MemorySpace.SMEM),   # bias scalars
            pl.BlockSpec((tb, in_f), lambda i: (i, 0)),          # x batch tile
        ],
        out_specs=pl.BlockSpec((tb, out_f), lambda i: (i, 0)),   # out batch tile
        compiler_params=pltpu.CompilerParams(
            # Independent batch tiles: shards across both TCs on v7x,
            # harmless on single-TC v5e/v6e.
            dimension_semantics=("parallel",),
            # Padded x tile is (tb, 128)*4B per buffer; stay well inside the
            # v7x 64 MiB physical VMEM / default scoped limit.
            vmem_limit_bytes=32 * 1024 * 1024,
        ),
        cost_estimate=pl.CostEstimate(
            flops=2 * padded_b * in_f * out_f,
            transcendentals=0,
            bytes_accessed=padded_b * (in_f + out_f) * itemsize
            + (in_f * out_f + out_f) * 4,
        ),
    )(w_flat, b_flat, x_in)

    if padded_b != B:
        out = out[:B]
    # Pass-through of the input, per the PyTorch forward's (output, x) return.
    return out, x


if __name__ == "__main__":
    key = jax.random.PRNGKey(0)
    kx, kw, kb = jax.random.split(key, 3)

    # Small demo batch; block_rows=16 forces a multi-step grid (grid=(4,)) so
    # the tiled/pipelined path is actually exercised.
    B = 64
    x = jax.random.normal(kx, (B, IN_F), dtype=jnp.float32)

    # Deterministic params mimicking nn.Linear default init U(-1/sqrt(4), 1/sqrt(4)).
    bound = 1.0 / jnp.sqrt(jnp.float32(IN_F))
    weight = jax.random.uniform(kw, (OUT_F, IN_F), jnp.float32, -bound, bound)
    bias = jax.random.uniform(kb, (OUT_F,), jnp.float32, -bound, bound)

    # use_pallas=True: run the kernel even at this tiny batch (production
    # dispatch would fall back to fused XLA below ~4K rows).
    out, x_passthrough = logistic_rg_forward(
        x, weight, bias, block_rows=16, use_pallas=True)
    jax.block_until_ready((out, x_passthrough))

    # Reference check in plain JAX.
    ref = x @ weight.T + bias
    assert out.shape == (B, OUT_F)
    assert x_passthrough.shape == (B, IN_F)
    assert jnp.allclose(out, ref, atol=1e-5, rtol=1e-5), "mismatch vs reference"
    assert jnp.array_equal(x_passthrough, x), "pass-through x mismatch"

    print("KERNEL_OK")
</pallas_src>

<mosaic_0001>
module attributes {stable_mosaic.version = 11 : i64} {
  func.func @_linear_kernel(%arg0: i32, %arg1: memref<8xf32, #tpu.memory_space<smem>>, %arg2: memref<2xf32, #tpu.memory_space<smem>>, %arg3: memref<16x4xf32, #tpu.memory_space<vmem>>, %arg4: memref<16x2xf32, #tpu.memory_space<vmem>>) attributes {dimension_semantics = [#tpu.dimension_semantics<parallel>], iteration_bounds = array<i64: 4>, scalar_prefetch = 0 : i64, scratch_operands = 0 : i64, tpu.core_type = #tpu.core_type<tc>, window_params = [{transform_indices = @transform_0, window_bounds = array<i64: 8>}, {transform_indices = @transform_1, window_bounds = array<i64: 2>}, {transform_indices = @transform_2, window_bounds = array<i64: 16, 4>}, {transform_indices = @transform_3, window_bounds = array<i64: 16, 2>}]} {
    %c0 = arith.constant 0 : index
    %c0_0 = arith.constant 0 : index
    %0 = vector.load %arg3[%c0, %c0_0] : memref<16x4xf32, #tpu.memory_space<vmem>>, vector<16x4xf32>
    %1 = tpu.iota {dimensions = array<i32: 1>} : vector<16x2xi32>
    %c0_1 = arith.constant 0 : index
    %2 = memref.load %arg2[%c0_1] : memref<2xf32, #tpu.memory_space<smem>>
    %c1 = arith.constant 1 : index
    %3 = memref.load %arg2[%c1] : memref<2xf32, #tpu.memory_space<smem>>
    %4 = vector.broadcast %2 : f32 to vector<16x2xf32>
    %c1_i32 = arith.constant 1 : i32
    %5 = vector.broadcast %c1_i32 : i32 to vector<16x2xi32>
    %6 = arith.cmpi eq, %1, %5 : vector<16x2xi32>
    %7 = vector.broadcast %3 : f32 to vector<16x2xf32>
    %8 = arith.select %6, %7, %4 : vector<16x2xi1>, vector<16x2xf32>
    %c0_2 = arith.constant 0 : index
    %9 = memref.load %arg1[%c0_2] : memref<8xf32, #tpu.memory_space<smem>>
    %c4 = arith.constant 4 : index
    %10 = memref.load %arg1[%c4] : memref<8xf32, #tpu.memory_space<smem>>
    %11 = vector.broadcast %9 : f32 to vector<16x2xf32>
    %c1_i32_3 = arith.constant 1 : i32
    %12 = vector.broadcast %c1_i32_3 : i32 to vector<16x2xi32>
    %13 = arith.cmpi eq, %1, %12 : vector<16x2xi32>
    %14 = vector.broadcast %10 : f32 to vector<16x2xf32>
    %15 = arith.select %13, %14, %11 : vector<16x2xi1>, vector<16x2xf32>
    %16 = vector.extract_strided_slice %0 {offsets = [0, 0], sizes = [16, 1], strides = [1, 1]} : vector<16x4xf32> to vector<16x1xf32>
    %17 = vector.broadcast %16 : vector<16x1xf32> to vector<16x2xf32>
    %18 = arith.mulf %17, %15 : vector<16x2xf32>
    %19 = arith.addf %8, %18 : vector<16x2xf32>
    %c1_4 = arith.constant 1 : index
    %20 = memref.load %arg1[%c1_4] : memref<8xf32, #tpu.memory_space<smem>>
    %c5 = arith.constant 5 : index
    %21 = memref.load %arg1[%c5] : memref<8xf32, #tpu.memory_space<smem>>
    %22 = vector.broadcast %20 : f32 to vector<16x2xf32>
    %c1_i32_5 = arith.constant 1 : i32
    %23 = vector.broadcast %c1_i32_5 : i32 to vector<16x2xi32>
    %24 = arith.cmpi eq, %1, %23 : vector<16x2xi32>
    %25 = vector.broadcast %21 : f32 to vector<16x2xf32>
    %26 = arith.select %24, %25, %22 : vector<16x2xi1>, vector<16x2xf32>
    %27 = vector.extract_strided_slice %0 {offsets = [0, 1], sizes = [16, 1], strides = [1, 1]} : vector<16x4xf32> to vector<16x1xf32>
    %28 = vector.broadcast %27 : vector<16x1xf32> to vector<16x2xf32>
    %29 = arith.mulf %28, %26 : vector<16x2xf32>
    %30 = arith.addf %19, %29 : vector<16x2xf32>
    %c2 = arith.constant 2 : index
    %31 = memref.load %arg1[%c2] : memref<8xf32, #tpu.memory_space<smem>>
    %c6 = arith.constant 6 : index
    %32 = memref.load %arg1[%c6] : memref<8xf32, #tpu.memory_space<smem>>
    %33 = vector.broadcast %31 : f32 to vector<16x2xf32>
    %c1_i32_6 = arith.constant 1 : i32
    %34 = vector.broadcast %c1_i32_6 : i32 to vector<16x2xi32>
    %35 = arith.cmpi eq, %1, %34 : vector<16x2xi32>
    %36 = vector.broadcast %32 : f32 to vector<16x2xf32>
    %37 = arith.select %35, %36, %33 : vector<16x2xi1>, vector<16x2xf32>
    %38 = vector.extract_strided_slice %0 {offsets = [0, 2], sizes = [16, 1], strides = [1, 1]} : vector<16x4xf32> to vector<16x1xf32>
    %39 = vector.broadcast %38 : vector<16x1xf32> to vector<16x2xf32>
    %40 = arith.mulf %39, %37 : vector<16x2xf32>
    %41 = arith.addf %30, %40 : vector<16x2xf32>
    %c3 = arith.constant 3 : index
    %42 = memref.load %arg1[%c3] : memref<8xf32, #tpu.memory_space<smem>>
    %c7 = arith.constant 7 : index
    %43 = memref.load %arg1[%c7] : memref<8xf32, #tpu.memory_space<smem>>
    %44 = vector.broadcast %42 : f32 to vector<16x2xf32>
    %c1_i32_7 = arith.constant 1 : i32
    %45 = vector.broadcast %c1_i32_7 : i32 to vector<16x2xi32>
    %46 = arith.cmpi eq, %1, %45 : vector<16x2xi32>
    %47 = vector.broadcast %43 : f32 to vector<16x2xf32>
    %48 = arith.select %46, %47, %44 : vector<16x2xi1>, vector<16x2xf32>
    %49 = vector.extract_strided_slice %0 {offsets = [0, 3], sizes = [16, 1], strides = [1, 1]} : vector<16x4xf32> to vector<16x1xf32>
    %50 = vector.broadcast %49 : vector<16x1xf32> to vector<16x2xf32>
    %51 = arith.mulf %50, %48 : vector<16x2xf32>
    %52 = arith.addf %41, %51 : vector<16x2xf32>
    %c0_8 = arith.constant 0 : index
    %c0_9 = arith.constant 0 : index
    %53 = vector.load %arg4[%c0_8, %c0_9] : memref<16x2xf32, #tpu.memory_space<vmem>>, vector<16x2xf32>
    tpu.vector_store %arg4[%c0_8, %c0_9], %52 {strides = array<i32>} : memref<16x2xf32, #tpu.memory_space<vmem>>, vector<16x2xf32>,
    return
  }
  func.func @transform_0(%arg0: i32) -> i32 {
    %c0_i32 = arith.constant 0 : i32
    %c0_i32_0 = arith.constant 0 : i32
    return %c0_i32 : i32
  }
  func.func @transform_1(%arg0: i32) -> i32 {
    %c0_i32 = arith.constant 0 : i32
    %c0_i32_0 = arith.constant 0 : i32
    return %c0_i32 : i32
  }
  func.func @transform_2(%arg0: i32) -> (i32, i32) {
    %c0_i32 = arith.constant 0 : i32
    %c0_i32_0 = arith.constant 0 : i32
    return %arg0, %c0_i32 : i32, i32
  }
  func.func @transform_3(%arg0: i32) -> (i32, i32) {
    %c0_i32 = arith.constant 0 : i32
    %c0_i32_0 = arith.constant 0 : i32
    return %arg0, %c0_i32 : i32, i32
  }
}

</mosaic_0001>

<llo_original>
// kernel: tpu_custom_call.1
$region0: #{tpu_custom_call.1}
  #allocation0 [shape = 'u32[]', space=smem, size = 0x4, offset = 0x4, fixed_abs, tag = 'smem constant byte address 0x4 - core index']
  #allocation1 [shape = 'u32[72,128]{1,0:T(1,128)}', space=vmem, size = 0x9000, scoped, tag = 'internal scratch']
  %s0 = inlined_call_operand.vmem [shape: f32[8], index: 0, kind: input, shape index: {}]
  %s1 = inlined_call_operand.vmem [shape: f32[2], index: 1, kind: input, shape index: {}]
  %s2 = inlined_call_operand.vmem [shape: f32[64,4], index: 2, kind: input, shape index: {}]
  %s3 = inlined_call_operand.vmem [shape: f32[64,2], index: 3, kind: output, shape index: {}]
  %s4 = sld [smem:[#allocation0]]
  $region53: #{tpu_custom_call.1} parent=0
    _
  %s6 = ssub.s32 1, %s4
  %s7 = scalar_select 0, %s6, %s4
  $region1: #{tpu_custom_call.1} parent=0
    #allocation2 [shape = 'u8[512]{0}', space=smem, size = 0x200, scoped, tag = 'input window, operand 0, single buffered']
    #allocation3 [shape = 's32[2]{0}', space=sflag, size = 0x8, scoped, tag = 'scoped memory for tpu_custom_call.1']
    #allocation4 [shape = 'u8[512]{0}', space=smem, size = 0x200, scoped, tag = 'input window, operand 1, single buffered']
    #allocation5 [shape = 's32[1]{0}', space=sflag, size = 0x4, scoped, tag = 'scoped memory for tpu_custom_call.1']
    %8 = vsyncpa [#allocation3], 0
    %9 = vsyncpa [#allocation5], 0
    loop: start=0, step=1, limit=6
    $region2: #{tpu_custom_call.1} parent=1 // loop_pre_header
      _
    $region3: #{tpu_custom_call.1} parent=1 // loop_header
      %s11 = sphi 0, %s15
      %p12 = scmp.ge.s32.totalorder %s11, 6
      %s19 = sphi 0, %s19
      %s21 = sphi 0, %s19
      %s22 = sphi 0, %s21
      %s36 = sphi 0, %s22
      %s40 = sphi 0, %s40
      %s42 = sphi 0, %s40
      %s43 = sphi 0, %s42
      %s57 = sphi 0, %s43
      %s63 = sphi 0, %s65
      %s66 = sphi 0, %s63
      %s67 = sphi 0, %s66
      %s83 = sphi 0, %s67
      %s89 = sphi 0, %s91
      %s92 = sphi 0, %s89
      %s93 = sphi 0, %s92
      %s109 = sphi 0, %s93
    $region4: #{tpu_custom_call.1} parent=1 // loop_header_branch
      %14 = sbr.rel (%p12) target = $region8
    $region5: #{tpu_custom_call.1} parent=1 // loop_body
      %s16 = ssub.s32 %s11, 1
      %s17 = ssub.s32 %s11, 2
      %s18 = sadd.s32 %s11, 1
      %s20 = sadd.s32 %s19, 1
      %p23 = scmp.eq.s32.totalorder %s11, 3
      %p24 = scmp.ne.s32.totalorder %s19, %s21
      %p25 = scmp.eq.s32.totalorder %s11, 0
      %p26 = por %p24, %p25
      %p27 = scmp.ne.s32.totalorder %s19, %s21
      %p28 = scmp.eq.s32.totalorder %s16, 3
      %p29 = por %p27, %p28
      %p30 = scmp.ne.s32.totalorder %s21, %s22
      %p31 = scmp.eq.s32.totalorder %s16, 0
      %p32 = por %p30, %p31
      %p33 = scmp.ne.s32.totalorder %s21, %s22
      %p34 = scmp.eq.s32.totalorder %s17, 3
      %p35 = por %p33, %p34
      %p37 = scmp.ne.s32.totalorder %s22, %s36
      %p38 = scmp.eq.s32.totalorder %s17, 0
      %p39 = por %p37, %p38
      %s41 = sadd.s32 %s40, 1
      %p44 = scmp.eq.s32.totalorder %s11, 3
      %p45 = scmp.ne.s32.totalorder %s40, %s42
      %p46 = scmp.eq.s32.totalorder %s11, 0
      %p47 = por %p45, %p46
      %p48 = scmp.ne.s32.totalorder %s40, %s42
      %p49 = scmp.eq.s32.totalorder %s16, 3
      %p50 = por %p48, %p49
      %p51 = scmp.ne.s32.totalorder %s42, %s43
      %p52 = scmp.eq.s32.totalorder %s16, 0
      %p53 = por %p51, %p52
      %p54 = scmp.ne.s32.totalorder %s42, %s43
      %p55 = scmp.eq.s32.totalorder %s17, 3
      %p56 = por %p54, %p55
      %p58 = scmp.ne.s32.totalorder %s43, %s57
      %p59 = scmp.eq.s32.totalorder %s17, 0
      %p60 = por %p58, %p59
      %s61 = ssub.s32 %s11, %s18
      %p62 = scmp.eq.s32.totalorder %s61, 0
      %s64 = sadd.s32 %s63, 1
      %s65 = scalar_select %p62, %s63, %s64
      %p68 = pneg %p62
      %p69 = scmp.eq.s32.totalorder %s11, 3
      %p70 = por %p68, %p69
      %p71 = scmp.ne.s32.totalorder %s63, %s66
      %p72 = scmp.eq.s32.totalorder %s11, 0
      %p73 = por %p71, %p72
      %p74 = scmp.ne.s32.totalorder %s63, %s66
      %p75 = scmp.eq.s32.totalorder %s16, 3
      %p76 = por %p74, %p75
      %p77 = scmp.ne.s32.totalorder %s66, %s67
      %p78 = scmp.eq.s32.totalorder %s16, 0
      %p79 = por %p77, %p78
      %p80 = scmp.ne.s32.totalorder %s66, %s67
      %p81 = scmp.eq.s32.totalorder %s17, 3
      %p82 = por %p80, %p81
      %p84 = scmp.ne.s32.totalorder %s67, %s83
      %p85 = scmp.eq.s32.totalorder %s17, 0
      %p86 = por %p84, %p85
      %s87 = ssub.s32 %s11, %s18
      %p88 = scmp.eq.s32.totalorder %s87, 0
      %s90 = sadd.s32 %s89, 1
      %s91 = scalar_select %p88, %s89, %s90
      %p94 = pneg %p88
      %p95 = scmp.eq.s32.totalorder %s11, 3
      %p96 = por %p94, %p95
      %p97 = scmp.ne.s32.totalorder %s89, %s92
      %p98 = scmp.eq.s32.totalorder %s11, 0
      %p99 = por %p97, %p98
      %p100 = scmp.ne.s32.totalorder %s89, %s92
      %p101 = scmp.eq.s32.totalorder %s16, 3
      %p102 = por %p100, %p101
      %p103 = scmp.ne.s32.totalorder %s92, %s93
      %p104 = scmp.eq.s32.totalorder %s16, 0
      %p105 = por %p103, %p104
      %p106 = scmp.ne.s32.totalorder %s92, %s93
      %p107 = scmp.eq.s32.totalorder %s17, 3
      %p108 = por %p106, %p107
      %p110 = scmp.ne.s32.totalorder %s93, %s109
      %p111 = scmp.eq.s32.totalorder %s17, 0
      %p112 = por %p110, %p111
      %p113 = scmp.le.s32.totalorder 1, %s11
      %p114 = scmp.lt.s32.totalorder %s11, 5
      %p115 = pnand %p113, %p114
      %p116 = pneg %p115
      // Predicated region
      $region9: #{tpu_custom_call.1} parent=5 // pred_check
        _
      $region10: #{tpu_custom_call.1} parent=5 // pred_check_branch
        %118 = sbr.rel (%p115) target = $region12
      $region11: #{tpu_custom_call.1} parent=5 // pred_region
        %s119 = ssub.s32 %s11, 1
        // Predicated region
        $region13: #{tpu_custom_call.1} parent=11 // pred_check
          %p120 = pneg %p32
        $region14: #{tpu_custom_call.1} parent=11 // pred_check_branch
          %122 = sbr.rel (%p120) target = $region16
        $region15: #{tpu_custom_call.1} parent=11 // pred_region
          %124 = vsyncadd [#allocation3], 0
          %s126 = sshll.u32 %s0, 4
          %s127 = int_to_ptr.vmem [resolvable:$true] %s126
          %129 = dma.vmem_to_smem %s127, 16, [#allocation2], [#allocation3]
        $region16: #{tpu_custom_call.1} parent=11 // pred_fallthru
          _
        // Predicated region
        $region17: #{tpu_custom_call.1} parent=11 // pred_check
          %p130 = pneg %p53
        $region18: #{tpu_custom_call.1} parent=11 // pred_check_branch
          %132 = sbr.rel (%p130) target = $region20
        $region19: #{tpu_custom_call.1} parent=11 // pred_region
          %134 = vsyncadd [#allocation5], 0
          %s136 = sshll.u32 %s1, 4
          %s137 = int_to_ptr.vmem [resolvable:$true] %s136
          %139 = dma.vmem_to_smem %s137, 16, [#allocation4], [#allocation5]
        $region20: #{tpu_custom_call.1} parent=11 // pred_fallthru
          _
      $region12: #{tpu_custom_call.1} parent=5 // pred_fallthru
        _
      %p140 = scmp.lt.s32.totalorder %s11, 4
      // Predicated region
      $region21: #{tpu_custom_call.1} parent=5 // pred_check
        %p141 = pneg %p140
      $region22: #{tpu_custom_call.1} parent=5 // pred_check_branch
        %143 = sbr.rel (%p141) target = $region24
      $region23: #{tpu_custom_call.1} parent=5 // pred_region
        // Predicated region
        $region25: #{tpu_custom_call.1} parent=23 // pred_check
          %p144 = pneg %p73
        $region26: #{tpu_custom_call.1} parent=23 // pred_check_branch
          %146 = sbr.rel (%p144) target = $region28
        $region27: #{tpu_custom_call.1} parent=23 // pred_region
          %s147 = smul.u32 2, %s11
          %p148 = scmp.lt.s32.totalorder %s147, 7
          %s149 = scalar_select %p148, %s147, 7
          %s150 = smul.addr %s149, 8
          %s151 = scalar_lea.vmem %s2, %s150
          %s152 = smul.u32 2, %s11
        $region28: #{tpu_custom_call.1} parent=23 // pred_fallthru
          _
      $region24: #{tpu_custom_call.1} parent=5 // pred_fallthru
        _
      %p153 = scmp.le.s32.totalorder 1, %s11
      %p154 = scmp.lt.s32.totalorder %s11, 5
      %p155 = pnand %p153, %p154
      %p156 = pneg %p155
      // Predicated region
      $region29: #{tpu_custom_call.1} parent=5 // pred_check
        _
      $region30: #{tpu_custom_call.1} parent=5 // pred_check_branch
        %158 = sbr.rel (%p155) target = $region32
      $region31: #{tpu_custom_call.1} parent=5 // pred_region
        %s159 = ssub.s32 %s11, 1
        // Predicated region
        $region33: #{tpu_custom_call.1} parent=31 // pred_check
          %p160 = pneg %p32
        $region34: #{tpu_custom_call.1} parent=31 // pred_check_branch
          %162 = sbr.rel (%p160) target = $region36
        $region35: #{tpu_custom_call.1} parent=31 // pred_region
          %164 = dma.done [#allocation3], 16
        $region36: #{tpu_custom_call.1} parent=31 // pred_fallthru
          _
        // Predicated region
        $region37: #{tpu_custom_call.1} parent=31 // pred_check
          %p165 = pneg %p53
        $region38: #{tpu_custom_call.1} parent=31 // pred_check_branch
          %167 = sbr.rel (%p165) target = $region40
        $region39: #{tpu_custom_call.1} parent=31 // pred_region
          %169 = dma.done [#allocation5], 16
        $region40: #{tpu_custom_call.1} parent=31 // pred_fallthru
          _
        %170 = sfence
        %p171 = pneg %p32
        %p172 = pneg %p29
        %p173 = pneg %p53
        %p174 = pneg %p50
        %s175 = smul.u32 2, %s16
        %p176 = scmp.lt.s32.totalorder %s175, 7
        %s177 = scalar_select %p176, %s175, 7
        %s178 = smul.addr %s177, 8
        %s179 = scalar_lea.vmem %s2, %s178
        %p180 = pneg %p79
        %p181 = pneg %p76
        %p182 = pneg %p105
        %p183 = pneg %p102
        %s184 = smul.u32 2, %s16
        %p185 = scmp.lt.s32.totalorder %s184, 7
        %s186 = scalar_select %p185, %s184, 7
        %s187 = smul.addr %s186, 8
        %s188 = scalar_lea.vmem %s3, %s187
        %s189 = smul.u32 2, %s16
        %p190 = scmp.lt.s32.totalorder %s189, 7
        %s191 = scalar_select %p190, %s189, 7
        %s192 = smul.addr %s191, 8
        %s193 = scalar_lea.vmem %s2, %s192
        %s194 = smul.u32 2, %s16
        %s195 = smul.u32 2, %s16
        %p196 = scmp.lt.s32.totalorder %s195, 7
        %s197 = scalar_select %p196, %s195, 7
        %s198 = smul.addr %s197, 8
        %s199 = scalar_lea.vmem %s3, %s198
        %s200 = smul.u32 2, %s16
        %v201 = vld [vmem:[%s193] sm:$0xff]
        %v202 = vld [vmem:[%s193 + $0x8] sm:$0xff]
        %v203 = vlaneseq
        %v204 = vand.u32 %v203, 127
        %s205 = sld [smem:[#allocation4]]
        %s206 = sld [smem:[#allocation4 + $0x1]]
        %v207 = vstv %s205
        %vm208 = vcmp.eq.s32.totalorder %v204, 1
        %v209 = vstv %s206
        %v210 = vsel %vm208, %v209, %v207
        %s211 = sld [smem:[#allocation2]]
        %s212 = sld [smem:[#allocation2 + $0x4]]
        %v213 = vstv %s211
        %v214 = vstv %s212
        %v215 = vsel %vm208, %v214, %v213
        %217 = vset.pattern.permute.xlu0 0
        %218 = vperm.xlu0 %217, %v201
        %v219 = vpop.permute.xlu0 %218
        %222 = vset.pattern.permute.xlu0 0
        %223 = vperm.xlu0 %222, %v202
        %v224 = vpop.permute.xlu0 %223
        %v226 = vmul.f32 %v219, %v215
        %v227 = vmul.f32 %v224, %v215
        %v228 = vadd.f32 %v210, %v226
        %v229 = vadd.f32 %v210, %v227
        %s230 = sld [smem:[#allocation2 + $0x1]]
        %s231 = sld [smem:[#allocation2 + $0x5]]
        %v232 = vstv %s230
        %v233 = vstv %s231
        %v234 = vsel %vm208, %v233, %v232
        %235 = vset.pattern.permute.xlu0 1
        %236 = vperm.xlu0 %235, %v201
        %v237 = vpop.permute.xlu0 %236
        %239 = vset.pattern.permute.xlu0 1
        %240 = vperm.xlu0 %239, %v202
        %v241 = vpop.permute.xlu0 %240
        %v243 = vmul.f32 %v237, %v234
        %v244 = vmul.f32 %v241, %v234
        %v245 = vadd.f32 %v228, %v243
        %v246 = vadd.f32 %v229, %v244
        %s247 = sld [smem:[#allocation2 + $0x2]]
        %s248 = sld [smem:[#allocation2 + $0x6]]
        %v249 = vstv %s247
        %v250 = vstv %s248
        %v251 = vsel %vm208, %v250, %v249
        %252 = vset.pattern.permute.xlu0 2
        %253 = vperm.xlu0 %252, %v201
        %v254 = vpop.permute.xlu0 %253
        %256 = vset.pattern.permute.xlu0 2
        %257 = vperm.xlu0 %256, %v202
        %v258 = vpop.permute.xlu0 %257
        %v260 = vmul.f32 %v254, %v251
        %v261 = vmul.f32 %v258, %v251
        %v262 = vadd.f32 %v245, %v260
        %v263 = vadd.f32 %v246, %v261
        %s264 = sld [smem:[#allocation2 + $0x3]]
        %s265 = sld [smem:[#allocation2 + $0x7]]
        %v266 = vstv %s264
        %v267 = vstv %s265
        %v268 = vsel %vm208, %v267, %v266
        %269 = vset.pattern.permute.xlu0 3
        %270 = vperm.xlu0 %269, %v201
        %v271 = vpop.permute.xlu0 %270
        %273 = vset.pattern.permute.xlu0 3
        %274 = vperm.xlu0 %273, %v202
        %v275 = vpop.permute.xlu0 %274
        %v277 = vmul.f32 %v271, %v268
        %v278 = vmul.f32 %v275, %v268
        %v279 = vadd.f32 %v262, %v277
        %v280 = vadd.f32 %v263, %v278
        %vm281 = vcmask 15360
        %282 = vst.msk [vmem:[%s199] sm:$0xff] %vm281, %v279
        %283 = vst.msk [vmem:[%s199 + $0x8] sm:$0xff] %vm281, %v280
        %s284 = smul.u32 2, %s16
        %p285 = scmp.lt.s32.totalorder %s284, 7
        %s286 = scalar_select %p285, %s284, 7
        %s287 = smul.addr %s286, 8
        %s288 = scalar_lea.vmem %s3, %s287
        // Predicated region
        $region41: #{tpu_custom_call.1} parent=31 // pred_check
          %p289 = pneg %p102
        $region42: #{tpu_custom_call.1} parent=31 // pred_check_branch
          %291 = sbr.rel (%p289) target = $region44
        $region43: #{tpu_custom_call.1} parent=31 // pred_region
          %s292 = smul.u32 2, %s16
        $region44: #{tpu_custom_call.1} parent=31 // pred_fallthru
          _
      $region32: #{tpu_custom_call.1} parent=5 // pred_fallthru
        _
      %p293 = scmp.le.s32.totalorder 2, %s11
      // Predicated region
      $region45: #{tpu_custom_call.1} parent=5 // pred_check
        %p294 = pneg %p293
      $region46: #{tpu_custom_call.1} parent=5 // pred_check_branch
        %296 = sbr.rel (%p294) target = $region48
      $region47: #{tpu_custom_call.1} parent=5 // pred_region
        %s297 = ssub.s32 %s11, 2
        // Predicated region
        $region49: #{tpu_custom_call.1} parent=47 // pred_check
          %p298 = pneg %p108
        $region50: #{tpu_custom_call.1} parent=47 // pred_check_branch
          %300 = sbr.rel (%p298) target = $region52
        $region51: #{tpu_custom_call.1} parent=47 // pred_region
          %s301 = smul.u32 2, %s17
          %p302 = scmp.lt.s32.totalorder %s301, 7
          %s303 = scalar_select %p302, %s301, 7
          %s304 = smul.addr %s303, 8
          %s305 = scalar_lea.vmem %s3, %s304
        $region52: #{tpu_custom_call.1} parent=47 // pred_fallthru
          _
      $region48: #{tpu_custom_call.1} parent=5 // pred_fallthru
        _
    $region6: #{tpu_custom_call.1} parent=1 // loop_footer
      %s15 = sadd.s32 1, %s11
    $region7: #{tpu_custom_call.1} parent=1 // loop_footer_branch
      %10 = sbr.rel target = $region3
    $region8: #{tpu_custom_call.1} parent=1 // loop_exit
      _
    %306 = vsyncpa [#allocation3], 1
    %s307 = scalar_lea.sflag [#allocation3], 1
    %308 = vsyncpa %s307, 1
    %309 = vsyncpa [#allocation5], 1

</llo_original>
